<compile_context>
chip_gen: v6e
topology: v6e:2x2x1
jax: 0.10.0
libtpu: 0.0.40
codegen_flags: <defaults>
</compile_context>

<pallas_src>
import jax
import jax.numpy as jnp
from jax.experimental import pallas as pl
from jax.experimental.pallas import tpu as pltpu

H1 = 64
H2 = 32
OUT = 1


def _round_up(n, m):
    return ((n + m - 1) // m) * m


def _pick_tile_b(B, D):
    """Batch tile for B > 128.

    Sized so (double-buffered f32 x tile) + (bf16 x copy) + f32 h1/h2
    intermediates + double-buffered output stay under ~12 MiB — inside v5e's
    16 MiB scoped-VMEM default (v6e/v7x default 32 MiB).  Always a multiple of
    128 and chosen so the grid has an even number (>=2) of steps, keeping both
    v7x TensorCores busy and the last dims layout-friendly.
    """
    per_row = 8 * D + 2 * D + 4 * H1 + 4 * H2 + 8     # bytes of VMEM per batch row
    budget = 12 * 1024 * 1024
    cap = max(256, (budget // per_row) // 128 * 128)
    tile_max = min(8192, cap)
    steps = max(2, pl.cdiv(B, tile_max))               # >=2 grid steps
    if steps % 2:                                      # even -> balanced across 2 TCs
        steps += 1
    return min(tile_max, _round_up(pl.cdiv(B, steps), 128))


def _critic_kernel(x_ref, w1_ref, b1_ref, w2_ref, b2_ref, w3_ref, b3_ref, o_ref):
    # Fused MLP on one (TILE_B, D) batch tile.
    # Cast activations to bf16 in-kernel (cheap VPU pack, no extra HBM pass) so the
    # MXU runs native bf16 matmuls; accumulate in f32; bias/ReLU stay f32.
    x = x_ref[...].astype(jnp.bfloat16)                                     # (TB, D)
    h1 = jnp.dot(x, w1_ref[...], preferred_element_type=jnp.float32)        # (TB, 64) f32
    h1 = jnp.maximum(h1 + b1_ref[...], 0.0)                                 # ReLU (f32)
    h2 = jnp.dot(h1.astype(jnp.bfloat16), w2_ref[...],
                 preferred_element_type=jnp.float32)                        # (TB, 32) f32
    h2 = jnp.maximum(h2 + b2_ref[...], 0.0)                                 # ReLU (f32)
    # Value head: VPU broadcast-multiply by the (1,32) w3 row + lane reduce.
    # Avoids a minor-dim MXU contraction / possible XLU transpose of h2.
    y = jnp.sum(h2 * w3_ref[...], axis=-1, keepdims=True)                   # (TB, 1)
    o_ref[...] = (y + b3_ref[0]).astype(o_ref.dtype)


def critic_forward(x, params):
    """x: (B, input_size) float32 -> (B, 1) float32."""
    w1, b1, w2, b2, w3, b3 = params
    B, D = x.shape

    # One-time tiny cast: bf16 weights so the MXU takes its native bf16 path.
    w1b = w1.astype(jnp.bfloat16)
    w2b = w2.astype(jnp.bfloat16)

    if B <= 128:
        # Small/inference batch: a single full-batch tile (pad only a few rows).
        tile_b = _round_up(B, 8)
        if tile_b != B:
            x = jnp.pad(x, ((0, tile_b - B), (0, 0)))
        b_total = tile_b
    else:
        # Rollout batch: large 128-aligned tiles, no full-array pad; Pallas masks
        # the partial last block (rows are independent, padded rows are sliced off).
        tile_b = _pick_tile_b(B, D)
        b_total = B

    grid = (pl.cdiv(b_total, tile_b),)

    out = pl.pallas_call(
        _critic_kernel,
        out_shape=jax.ShapeDtypeStruct((b_total, OUT), jnp.float32),
        grid=grid,
        in_specs=[
            pl.BlockSpec((tile_b, D), lambda i: (i, 0)),        # x: streamed per tile
            pl.BlockSpec((D, H1), lambda i: (0, 0)),            # w1 (bf16): resident
            pl.BlockSpec((1, H1), lambda i: (0, 0)),            # b1 (f32): resident
            pl.BlockSpec((H1, H2), lambda i: (0, 0)),           # w2 (bf16): resident
            pl.BlockSpec((1, H2), lambda i: (0, 0)),            # b2 (f32): resident
            pl.BlockSpec((1, H2), lambda i: (0, 0)),            # w3 row (f32): resident
            pl.BlockSpec(memory_space=pltpu.MemorySpace.SMEM),  # b3: scalar in SMEM
        ],
        out_specs=pl.BlockSpec((tile_b, OUT), lambda i: (i, 0)),
        compiler_params=pltpu.CompilerParams(
            dimension_semantics=("parallel",),                  # shard batch axis on v7x
        ),
    )(x, w1b, b1, w2b, b2, w3, b3)

    return out[:B]


def init_critic_params(key, input_size):
    """Deterministic init mimicking PyTorch's default Linear init
    (uniform in [-1/sqrt(fan_in), 1/sqrt(fan_in)]).  Stored as (in, out)."""
    def linear(k, fan_in, fan_out):
        kw, kb = jax.random.split(k)
        bound = 1.0 / (fan_in ** 0.5)
        w = jax.random.uniform(kw, (fan_in, fan_out), jnp.float32, -bound, bound)
        b = jax.random.uniform(kb, (1, fan_out), jnp.float32, -bound, bound)
        return w, b

    k1, k2, k3 = jax.random.split(key, 3)
    w1, b1 = linear(k1, input_size, H1)
    w2, b2 = linear(k2, H1, H2)
    w3_col, b3_row = linear(k3, H2, OUT)
    w3 = w3_col.T                     # (1, 32) row layout for the VPU value head
    b3 = b3_row.reshape((OUT,))       # scalar bias, lives in SMEM in the kernel
    return (w1, b1, w2, b2, w3, b3)


def _reference(x, params):
    """Pure-JAX reference with the same bf16 operand rounding as the kernel
    (f32 accumulation), so tolerances can stay tight."""
    w1, b1, w2, b2, w3, b3 = params
    rb = lambda a: a.astype(jnp.bfloat16).astype(jnp.float32)
    h1 = jnp.maximum(rb(x) @ rb(w1) + b1, 0.0)
    h2 = jnp.maximum(rb(h1) @ rb(w2) + b2, 0.0)
    return h2 @ w3.T + b3


if __name__ == "__main__":
    key = jax.random.PRNGKey(0)
    k_params, k_x1, k_x2 = jax.random.split(key, 3)

    INPUT_SIZE = 32  # observation space size
    params = init_critic_params(k_params, INPUT_SIZE)

    # Small inference-style batch (single-tile path).
    BATCH = 8
    x_small = jax.random.normal(k_x1, (BATCH, INPUT_SIZE), dtype=jnp.float32)
    out_small = jax.block_until_ready(critic_forward(x_small, params))
    assert out_small.shape == (BATCH, 1)
    assert jnp.allclose(out_small, _reference(x_small, params), atol=2e-3, rtol=2e-3)

    # Larger rollout-style batch (multi-tile, even-grid, no-pad path).
    BIG = 2500
    x_big = jax.random.normal(k_x2, (BIG, INPUT_SIZE), dtype=jnp.float32)
    out_big = jax.block_until_ready(critic_forward(x_big, params))
    assert out_big.shape == (BIG, 1)
    assert jnp.allclose(out_big, _reference(x_big, params), atol=2e-3, rtol=2e-3)

    print("KERNEL_OK")
</pallas_src>

<mosaic_0001>
module attributes {stable_mosaic.version = 11 : i64} {
  func.func @_critic_kernel(%arg0: i32, %arg1: memref<8x32xf32, #tpu.memory_space<vmem>>, %arg2: memref<32x64xbf16, #tpu.memory_space<vmem>>, %arg3: memref<1x64xf32, #tpu.memory_space<vmem>>, %arg4: memref<64x32xbf16, #tpu.memory_space<vmem>>, %arg5: memref<1x32xf32, #tpu.memory_space<vmem>>, %arg6: memref<1x32xf32, #tpu.memory_space<vmem>>, %arg7: memref<1xf32, #tpu.memory_space<smem>>, %arg8: memref<8x1xf32, #tpu.memory_space<vmem>>) attributes {dimension_semantics = [#tpu.dimension_semantics<parallel>], iteration_bounds = array<i64: 1>, scalar_prefetch = 0 : i64, scratch_operands = 0 : i64, tpu.core_type = #tpu.core_type<tc>, window_params = [{transform_indices = @transform_0, window_bounds = array<i64: 8, 32>}, {pipeline_mode = #tpu.pipeline_mode<synchronous>, transform_indices = @transform_1, window_bounds = array<i64: 32, 64>}, {pipeline_mode = #tpu.pipeline_mode<synchronous>, transform_indices = @transform_2, window_bounds = array<i64: 1, 64>}, {pipeline_mode = #tpu.pipeline_mode<synchronous>, transform_indices = @transform_3, window_bounds = array<i64: 64, 32>}, {pipeline_mode = #tpu.pipeline_mode<synchronous>, transform_indices = @transform_4, window_bounds = array<i64: 1, 32>}, {pipeline_mode = #tpu.pipeline_mode<synchronous>, transform_indices = @transform_5, window_bounds = array<i64: 1, 32>}, {transform_indices = @transform_6, window_bounds = array<i64: 1>}, {transform_indices = @transform_7, window_bounds = array<i64: 8, 1>}]} {
    %c0 = arith.constant 0 : index
    %c0_0 = arith.constant 0 : index
    %0 = vector.load %arg1[%c0, %c0_0] : memref<8x32xf32, #tpu.memory_space<vmem>>, vector<8x32xf32>
    %1 = arith.truncf %0 : vector<8x32xf32> to vector<8x32xbf16>
    %c0_1 = arith.constant 0 : index
    %c0_2 = arith.constant 0 : index
    %2 = vector.load %arg2[%c0_1, %c0_2] : memref<32x64xbf16, #tpu.memory_space<vmem>>, vector<32x64xbf16>
    %cst = arith.constant dense<0.000000e+00> : vector<8x64xf32>
    %3 = tpu.matmul %1, %2, %cst {dimension_numbers = #tpu.dot_dimension_numbers<[1], [0], [0], [1], [0, 0, 1, 1], [], []>} : vector<8x32xbf16>, vector<32x64xbf16>, vector<8x64xf32> -> vector<8x64xf32>
    %c0_3 = arith.constant 0 : index
    %c0_4 = arith.constant 0 : index
    %4 = vector.load %arg3[%c0_3, %c0_4] : memref<1x64xf32, #tpu.memory_space<vmem>>, vector<1x64xf32>
    %5 = vector.broadcast %4 : vector<1x64xf32> to vector<8x64xf32>
    %6 = arith.addf %3, %5 : vector<8x64xf32>
    %cst_5 = arith.constant 0.000000e+00 : f32
    %7 = vector.broadcast %cst_5 : f32 to vector<8x64xf32>
    %8 = arith.maximumf %6, %7 : vector<8x64xf32>
    %9 = arith.truncf %8 : vector<8x64xf32> to vector<8x64xbf16>
    %c0_6 = arith.constant 0 : index
    %c0_7 = arith.constant 0 : index
    %10 = vector.load %arg4[%c0_6, %c0_7] : memref<64x32xbf16, #tpu.memory_space<vmem>>, vector<64x32xbf16>
    %cst_8 = arith.constant dense<0.000000e+00> : vector<8x32xf32>
    %11 = tpu.matmul %9, %10, %cst_8 {dimension_numbers = #tpu.dot_dimension_numbers<[1], [0], [0], [1], [0, 0, 1, 1], [], []>} : vector<8x64xbf16>, vector<64x32xbf16>, vector<8x32xf32> -> vector<8x32xf32>
    %c0_9 = arith.constant 0 : index
    %c0_10 = arith.constant 0 : index
    %12 = vector.load %arg5[%c0_9, %c0_10] : memref<1x32xf32, #tpu.memory_space<vmem>>, vector<1x32xf32>
    %13 = vector.broadcast %12 : vector<1x32xf32> to vector<8x32xf32>
    %14 = arith.addf %11, %13 : vector<8x32xf32>
    %cst_11 = arith.constant 0.000000e+00 : f32
    %15 = vector.broadcast %cst_11 : f32 to vector<8x32xf32>
    %16 = arith.maximumf %14, %15 : vector<8x32xf32>
    %c0_12 = arith.constant 0 : index
    %c0_13 = arith.constant 0 : index
    %17 = vector.load %arg6[%c0_12, %c0_13] : memref<1x32xf32, #tpu.memory_space<vmem>>, vector<1x32xf32>
    %18 = vector.broadcast %17 : vector<1x32xf32> to vector<8x32xf32>
    %19 = arith.mulf %16, %18 : vector<8x32xf32>
    %cst_14 = arith.constant dense<0.000000e+00> : vector<8xf32>
    %20 = vector.multi_reduction <add>, %19, %cst_14 [1] : vector<8x32xf32> to vector<8xf32>
    %21 = vector.shape_cast %20 : vector<8xf32> to vector<8x1xf32>
    %c0_15 = arith.constant 0 : index
    %22 = memref.load %arg7[%c0_15] : memref<1xf32, #tpu.memory_space<smem>>
    %23 = vector.broadcast %22 : f32 to vector<8x1xf32>
    %24 = arith.addf %21, %23 : vector<8x1xf32>
    %c0_16 = arith.constant 0 : index
    %c0_17 = arith.constant 0 : index
    %25 = vector.load %arg8[%c0_16, %c0_17] : memref<8x1xf32, #tpu.memory_space<vmem>>, vector<8x1xf32>
    tpu.vector_store %arg8[%c0_16, %c0_17], %24 {strides = array<i32>} : memref<8x1xf32, #tpu.memory_space<vmem>>, vector<8x1xf32>,
    return
  }
  func.func @transform_0(%arg0: i32) -> (i32, i32) {
    %c0_i32 = arith.constant 0 : i32
    %c0_i32_0 = arith.constant 0 : i32
    return %arg0, %c0_i32 : i32, i32
  }
  func.func @transform_1(%arg0: i32) -> (i32, i32) {
    %c0_i32 = arith.constant 0 : i32
    %c0_i32_0 = arith.constant 0 : i32
    %c0_i32_1 = arith.constant 0 : i32
    return %c0_i32, %c0_i32_0 : i32, i32
  }
  func.func @transform_2(%arg0: i32) -> (i32, i32) {
    %c0_i32 = arith.constant 0 : i32
    %c0_i32_0 = arith.constant 0 : i32
    %c0_i32_1 = arith.constant 0 : i32
    return %c0_i32, %c0_i32_0 : i32, i32
  }
  func.func @transform_3(%arg0: i32) -> (i32, i32) {
    %c0_i32 = arith.constant 0 : i32
    %c0_i32_0 = arith.constant 0 : i32
    %c0_i32_1 = arith.constant 0 : i32
    return %c0_i32, %c0_i32_0 : i32, i32
  }
  func.func @transform_4(%arg0: i32) -> (i32, i32) {
    %c0_i32 = arith.constant 0 : i32
    %c0_i32_0 = arith.constant 0 : i32
    %c0_i32_1 = arith.constant 0 : i32
    return %c0_i32, %c0_i32_0 : i32, i32
  }
  func.func @transform_5(%arg0: i32) -> (i32, i32) {
    %c0_i32 = arith.constant 0 : i32
    %c0_i32_0 = arith.constant 0 : i32
    %c0_i32_1 = arith.constant 0 : i32
    return %c0_i32, %c0_i32_0 : i32, i32
  }
  func.func @transform_6(%arg0: i32) -> i32 {
    %c0_i32 = arith.constant 0 : i32
    %c0_i32_0 = arith.constant 0 : i32
    return %c0_i32 : i32
  }
  func.func @transform_7(%arg0: i32) -> (i32, i32) {
    %c0_i32 = arith.constant 0 : i32
    %c0_i32_0 = arith.constant 0 : i32
    return %arg0, %c0_i32 : i32, i32
  }
}

</mosaic_0001>

<llo_original>
// kernel: tpu_custom_call.1
$region0: #{tpu_custom_call.1}
  #allocation0 [shape = 'u32[]', space=smem, size = 0x4, offset = 0x4, fixed_abs, tag = 'smem constant byte address 0x4 - core index']
  #allocation1 [shape = 'u32[144,128]{1,0:T(1,128)}', space=vmem, size = 0x12000, scoped, tag = 'internal scratch']
  #allocation2 [shape = 'f32[1]{0:T(128)S(6)}', space=smem, size = 0x200, scoped, tag = 'scoped memory for tpu_custom_call.1']
  %s0 = inlined_call_operand.vmem [shape: f32[8,32], index: 0, kind: input, shape index: {}]
  %s1 = inlined_call_operand.vmem [shape: bf16[32,64], index: 1, kind: input, shape index: {}]
  %s2 = inlined_call_operand.vmem [shape: f32[1,64], index: 2, kind: input, shape index: {}]
  %s3 = inlined_call_operand.vmem [shape: bf16[64,32], index: 3, kind: input, shape index: {}]
  %s4 = inlined_call_operand.vmem [shape: f32[1,32], index: 4, kind: input, shape index: {}]
  %s5 = inlined_call_operand.vmem [shape: f32[1,32], index: 5, kind: input, shape index: {}]
  %s6 = inlined_call_operand.<no memory space> [shape: f32[1], index: 6, kind: input, shape index: {}]
  %s7 = inlined_call_operand.vmem [shape: f32[8,1], index: 7, kind: output, shape index: {}]
  %s8 = sld [smem:[#allocation0]]
  $region38: #{tpu_custom_call.1} parent=0
    _
  %s10 = ssub.s32 1, %s8
  %s11 = scalar_select 0, %s10, %s8
  %12 = sst [smem:[#allocation2]] %s6
  // Predicated region
  $region2: #{tpu_custom_call.1} parent=0 // pred_check
    _
  $region3: #{tpu_custom_call.1} parent=0 // pred_check_branch
    %14 = sbr.rel (0) target = $region5
  $region4: #{tpu_custom_call.1} parent=0 // pred_region
    _
  $region5: #{tpu_custom_call.1} parent=0 // pred_fallthru
    _
  // Predicated region
  $region6: #{tpu_custom_call.1} parent=0 // pred_check
    _
  $region7: #{tpu_custom_call.1} parent=0 // pred_check_branch
    %16 = sbr.rel (0) target = $region9
  $region8: #{tpu_custom_call.1} parent=0 // pred_region
    _
  $region9: #{tpu_custom_call.1} parent=0 // pred_fallthru
    _
  // Predicated region
  $region10: #{tpu_custom_call.1} parent=0 // pred_check
    _
  $region11: #{tpu_custom_call.1} parent=0 // pred_check_branch
    %18 = sbr.rel (0) target = $region13
  $region12: #{tpu_custom_call.1} parent=0 // pred_region
    _
  $region13: #{tpu_custom_call.1} parent=0 // pred_fallthru
    _
  // Predicated region
  $region14: #{tpu_custom_call.1} parent=0 // pred_check
    _
  $region15: #{tpu_custom_call.1} parent=0 // pred_check_branch
    %20 = sbr.rel (0) target = $region17
  $region16: #{tpu_custom_call.1} parent=0 // pred_region
    _
  $region17: #{tpu_custom_call.1} parent=0 // pred_fallthru
    _
  // Predicated region
  $region18: #{tpu_custom_call.1} parent=0 // pred_check
    _
  $region19: #{tpu_custom_call.1} parent=0 // pred_check_branch
    %22 = sbr.rel (0) target = $region21
  $region20: #{tpu_custom_call.1} parent=0 // pred_region
    _
  $region21: #{tpu_custom_call.1} parent=0 // pred_fallthru
    _
  // Predicated region
  $region22: #{tpu_custom_call.1} parent=0 // pred_check
    _
  $region23: #{tpu_custom_call.1} parent=0 // pred_check_branch
    %24 = sbr.rel (0) target = $region25
  $region24: #{tpu_custom_call.1} parent=0 // pred_region
    _
  $region25: #{tpu_custom_call.1} parent=0 // pred_fallthru
    _
  // Predicated region
  $region26: #{tpu_custom_call.1} parent=0 // pred_check
    _
  $region27: #{tpu_custom_call.1} parent=0 // pred_check_branch
    %26 = sbr.rel (0) target = $region29
  $region28: #{tpu_custom_call.1} parent=0 // pred_region
    _
  $region29: #{tpu_custom_call.1} parent=0 // pred_fallthru
    _
  %v28 = vld [vmem:[%s0] sm:$0xff]
  %v29 = vpack.c.bf16 %v28, %v28
  %v30 = vld [vmem:[%s1] sm:$0xf]
  %v31 = vld [vmem:[%s1 + $0x4] sm:$0xf]
  %v32 = vld [vmem:[%s1 + $0x8] sm:$0xf]
  %v33 = vld [vmem:[%s1 + $0xc] sm:$0xf]
  %v34 = vld [vmem:[%s2] sm:$0x1]
  %v36 = vlaneseq
  %v37 = vshrl.u32 %v36, 7
  %v38 = vsub.s32 0, %v37
  %v39 = vrot.slane %v34, %v38
  %v45 = vunpack.c.l.b16 %v30
  %v46 = vunpack.c.l.b16 %v31
  %v47 = vunpack.c.l.b16 %v32
  %v48 = vunpack.c.l.b16 %v33
  %v49 = vpack.c.b16 %v46, %v45
  %v50 = vpack.c.b16 %v48, %v47
  %vm53 = vcmask 261120
  %v55 = vsel %vm53, %v29, 0
  %57 = vmatprep.subr.bf16.mxu0 0
  %58 = vmatpush1.bf16.msra.mxu0 0
  %59 = vmatprep.subr.bf16.mxu0 0
  %60 = vmatpush1.bf16.msra.mxu0 0
  %61 = vmatprep.subr.bf16.mxu0 0
  %62 = vmatpush1.bf16.msra.mxu0 0
  %63 = vmatprep.subr.bf16.mxu0 0
  %64 = vmatpush1.bf16.msra.mxu0 0
  %65 = vmatprep.subr.bf16.mxu0 0
  %66 = vmatpush1.bf16.msra.mxu0 0
  %67 = vmatprep.subr.bf16.mxu0 0
  %68 = vmatpush1.bf16.msra.mxu0 0
  %69 = vmatprep.subr.bf16.mxu0 0
  %70 = vmatpush1.bf16.msra.mxu0 %v50
  %71 = vmatprep.subr.bf16.mxu0 0
  %72 = vmatpush1.bf16.msra.mxu0 %v49
  %73 = vmatprep.subr.bf16.mxu0 0
  %74 = vmatpush2.bf16.msra.mxu0 0
  %75 = vmatprep.subr.bf16.mxu0 0
  %76 = vmatpush2.bf16.msra.mxu0 0
  %77 = vmatprep.subr.bf16.mxu0 0
  %78 = vmatpush2.bf16.msra.mxu0 0
  %79 = vmatprep.subr.bf16.mxu0 0
  %80 = vmatpush2.bf16.msra.mxu0 0
  %81 = vmatprep.subr.bf16.mxu0 0
  %82 = vmatpush2.bf16.msra.mxu0 0
  %83 = vmatprep.subr.bf16.mxu0 0
  %84 = vmatpush2.bf16.msra.mxu0 0
  %85 = vmatprep.subr.bf16.mxu0 0
  %86 = vmatpush2.bf16.msra.mxu0 0
  %87 = vmatprep.subr.bf16.mxu0 0
  %88 = vmatpush2.bf16.msra.mxu0 0
  %89 = vmatprep.mubr.bf16.mxu0 0
  %90 = vmatmul.mubr.bf16.gmra.mxu0 %v55
  %v91 = vpop.f32.mrf.mxu0
  %v92 = vadd.f32 %v39, %v91
  %v93 = vpop.f32.mrf.mxu0
  %v94 = vpop.f32.mrf.mxu0
  %v95 = vpop.f32.mrf.mxu0
  %96 = vdwg.mxu0
  %v97 = vmax.f32 %v92, 0.0
  %v98 = vpack.c.bf16 %v97, %v97
  %v99 = vld [vmem:[%s3] sm:$0xf]
  %v100 = vld [vmem:[%s3 + $0x4] sm:$0xf]
  %v101 = vld [vmem:[%s3 + $0x8] sm:$0xf]
  %v102 = vld [vmem:[%s3 + $0xc] sm:$0xf]
  %v103 = vld [vmem:[%s3 + $0x10] sm:$0xf]
  %v104 = vld [vmem:[%s3 + $0x14] sm:$0xf]
  %v105 = vld [vmem:[%s3 + $0x18] sm:$0xf]
  %v106 = vld [vmem:[%s3 + $0x1c] sm:$0xf]
  %v107 = vld [vmem:[%s4] sm:$0x1]
  %v109 = vlaneseq
  %v110 = vshrl.u32 %v109, 7
  %v111 = vsub.s32 0, %v110
  %v112 = vrot.slane %v107, %v111
  %v122 = vunpack.c.l.b16 %v99
  %v123 = vunpack.c.l.b16 %v100
  %v124 = vunpack.c.l.b16 %v101
  %v125 = vunpack.c.l.b16 %v102
  %v126 = vunpack.c.l.b16 %v103
  %v127 = vunpack.c.l.b16 %v104
  %v128 = vunpack.c.l.b16 %v105
  %v129 = vunpack.c.l.b16 %v106
  %v130 = vpack.c.b16 %v123, %v122
  %v131 = vpack.c.b16 %v125, %v124
  %v132 = vpack.c.b16 %v127, %v126
  %v133 = vpack.c.b16 %v129, %v128
  %vm138 = vcmask 523264
  %v140 = vsel %vm138, %v98, 0
  %142 = vmatprep.subr.bf16.mxu0 0
  %143 = vmatpush1.bf16.msra.mxu0 0
  %144 = vmatprep.subr.bf16.mxu0 0
  %145 = vmatpush1.bf16.msra.mxu0 0
  %146 = vmatprep.subr.bf16.mxu0 0
  %147 = vmatpush1.bf16.msra.mxu0 0
  %148 = vmatprep.subr.bf16.mxu0 0
  %149 = vmatpush1.bf16.msra.mxu0 0
  %150 = vmatprep.subr.bf16.mxu0 0
  %151 = vmatpush1.bf16.msra.mxu0 %v133
  %152 = vmatprep.subr.bf16.mxu0 0
  %153 = vmatpush1.bf16.msra.mxu0 %v132
  %154 = vmatprep.subr.bf16.mxu0 0
  %155 = vmatpush1.bf16.msra.mxu0 %v131
  %156 = vmatprep.subr.bf16.mxu0 0
  %157 = vmatpush1.bf16.msra.mxu0 %v130
  %158 = vmatprep.subr.bf16.mxu0 0
  %159 = vmatpush2.bf16.msra.mxu0 0
  %160 = vmatprep.subr.bf16.mxu0 0
  %161 = vmatpush2.bf16.msra.mxu0 0
  %162 = vmatprep.subr.bf16.mxu0 0
  %163 = vmatpush2.bf16.msra.mxu0 0
  %164 = vmatprep.subr.bf16.mxu0 0
  %165 = vmatpush2.bf16.msra.mxu0 0
  %166 = vmatprep.subr.bf16.mxu0 0
  %167 = vmatpush2.bf16.msra.mxu0 0
  %168 = vmatprep.subr.bf16.mxu0 0
  %169 = vmatpush2.bf16.msra.mxu0 0
  %170 = vmatprep.subr.bf16.mxu0 0
  %171 = vmatpush2.bf16.msra.mxu0 0
  %172 = vmatprep.subr.bf16.mxu0 0
  %173 = vmatpush2.bf16.msra.mxu0 0
  %174 = vmatprep.mubr.bf16.mxu0 0
  %175 = vmatmul.mubr.bf16.gmra.mxu0 %v140
  %v176 = vpop.f32.mrf.mxu0
  %v177 = vadd.f32 %v112, %v176
  %v178 = vpop.f32.mrf.mxu0
  %v179 = vpop.f32.mrf.mxu0
  %v180 = vpop.f32.mrf.mxu0
  %181 = vdwg.mxu0
  %v182 = vmax.f32 %v177, 0.0
  %v183 = vld [vmem:[%s5] sm:$0x1]
  %v185 = vlaneseq
  %v186 = vshrl.u32 %v185, 7
  %v187 = vsub.s32 0, %v186
  %v188 = vrot.slane %v183, %v187
  %v190 = vmul.f32 %v182, %v188
  %v191 = vsel %vm53, %v190, 0.0
  %192 = vadd.xlane.f32.xlu0 %v191
  %v193 = vpop.xlane.xlu0 %192
  %s194 = sld [smem:[#allocation2]]
  %v195 = vstv %s194
  %v196 = vadd.f32 %v193, %v195
  %vm197 = vcmask 7168
  %198 = vst.msk [vmem:[%s7] sm:$0xff] %vm197, %v196
  // Predicated region
  $region30: #{tpu_custom_call.1} parent=0 // pred_check
    _
  $region31: #{tpu_custom_call.1} parent=0 // pred_check_branch
    %200 = sbr.rel (0) target = $region33
  $region32: #{tpu_custom_call.1} parent=0 // pred_region
    _
  $region33: #{tpu_custom_call.1} parent=0 // pred_fallthru
    _
  // Predicated region
  $region34: #{tpu_custom_call.1} parent=0 // pred_check
    _
  $region35: #{tpu_custom_call.1} parent=0 // pred_check_branch
    %202 = sbr.rel (0) target = $region37
  $region36: #{tpu_custom_call.1} parent=0 // pred_region
    _
  $region37: #{tpu_custom_call.1} parent=0 // pred_fallthru
    _

</llo_original>
